<compile_context>
chip_gen: v6e
topology: v6e:2x2x1
jax: 0.10.0
libtpu: 0.0.40
codegen_flags: <defaults>
</compile_context>

<pallas_src>
import jax
import jax.numpy as jnp
from jax import lax
from jax.experimental import pallas as pl
from jax.experimental.pallas import tpu as pltpu

IN_FEATURES = 2
OUT_FEATURES = 1

# Largest lane tile per grid step (multiple of 128). (2, 128K) f32 input tile is
# 1 MiB of real data per DMA; padded + double-buffered VMEM stays well under
# the 32 MiB scoped limit requested below.
_MAX_BLOCK_LANES = 128 * 1024


# ---------------------------------------------------------------------------
# Kernel: pure-VPU affine map on a lane-dense batch tile.
#   wb_ref : SMEM (3,) f32  -> [w0, w1, b]
#   x_ref  : VMEM (2, bl)   -> feature-major batch tile
#   o_ref  : VMEM (1, bl)
# ---------------------------------------------------------------------------
def _widecnn_kernel(wb_ref, x_ref, o_ref):
    w0 = wb_ref[0]
    w1 = wb_ref[1]
    b = wb_ref[2]
    x = x_ref[...]                       # (2, bl)
    o_ref[...] = x[0:1, :] * w0 + x[1:2, :] * w1 + b


def _pick_block_lanes(batch):
    """Biggest lane-aligned tile, keeping >=2 grid steps for v7x megacore."""
    if batch <= 128:
        return batch                      # full-extent block (tiny problem)
    half = pl.cdiv(batch, 2)
    bl = (half // 128) * 128              # multiple of 128, at most ceil(B/2)
    bl = max(128, min(bl, _MAX_BLOCK_LANES))
    return bl


def widecnn_forward(x, w, b):
    """Forward pass of WIDECNN.

    x : (B, 2) f32
    w : (1, 2) f32   (torch nn.Linear weight layout: (out_features, in_features))
    b : (1,)  f32
    returns (B, 1) f32
    """
    B, K = x.shape
    assert K == IN_FEATURES and w.shape == (OUT_FEATURES, IN_FEATURES)

    # Layout plumbing (not compute): feature-major so batch -> lanes.
    x_fm = x.T                                        # (2, B)
    wb = jnp.concatenate([w.reshape(-1), b.reshape(-1)]).astype(jnp.float32)  # (3,)

    block_lanes = _pick_block_lanes(B)
    grid = (pl.cdiv(B, block_lanes),)

    out_fm = pl.pallas_call(
        _widecnn_kernel,
        out_shape=jax.ShapeDtypeStruct((OUT_FEATURES, B), jnp.float32),
        grid=grid,
        in_specs=[
            # three f32 scalars resident in SMEM
            pl.BlockSpec(memory_space=pltpu.MemorySpace.SMEM),
            # lane-dense batch tile of x (feature-major)
            pl.BlockSpec((IN_FEATURES, block_lanes), lambda i: (0, i)),
        ],
        out_specs=pl.BlockSpec((OUT_FEATURES, block_lanes), lambda i: (0, i)),
        compiler_params=pltpu.CompilerParams(
            dimension_semantics=("parallel",),        # megacore split on v7x
            vmem_limit_bytes=32 * 1024 * 1024,        # safe on v5e/v6e/v7x
        ),
    )(wb, x_fm)

    return out_fm.reshape(B, OUT_FEATURES)


# ---------------------------------------------------------------------------
# Deterministic PyTorch-style init + pure-JAX reference for correctness.
# ---------------------------------------------------------------------------
def init_params(key):
    kw, kb = jax.random.split(key)
    bound = 1.0 / jnp.sqrt(jnp.float32(IN_FEATURES))
    return {
        # nn.Linear stores weight as (out_features, in_features)
        "fc1_w": jax.random.uniform(kw, (OUT_FEATURES, IN_FEATURES),
                                    jnp.float32, -bound, bound),
        "fc1_b": jax.random.uniform(kb, (OUT_FEATURES,),
                                    jnp.float32, -bound, bound),
    }


def reference_forward(x, p):
    return jnp.dot(x, p["fc1_w"].T, precision=lax.Precision.HIGHEST) + p["fc1_b"]


if __name__ == "__main__":
    key = jax.random.PRNGKey(0)
    k_x, k_p = jax.random.split(key)

    B = 1024                                           # -> block_lanes=512, grid=(2,)
    x = jax.random.normal(k_x, (B, IN_FEATURES), jnp.float32)
    params = init_params(k_p)

    out = jax.block_until_ready(
        widecnn_forward(x, params["fc1_w"], params["fc1_b"]))
    ref = jax.block_until_ready(reference_forward(x, params))

    assert out.shape == (B, OUT_FEATURES), out.shape
    if not jnp.allclose(out, ref, rtol=1e-6, atol=1e-6):
        raise AssertionError(f"Pallas output mismatch:\n{out}\nvs reference\n{ref}")
    print("KERNEL_OK")
</pallas_src>

<mosaic_0001>
module attributes {stable_mosaic.version = 11 : i64} {
  func.func @_widecnn_kernel(%arg0: i32, %arg1: memref<3xf32, #tpu.memory_space<smem>>, %arg2: memref<2x512xf32, #tpu.memory_space<vmem>>, %arg3: memref<1x512xf32, #tpu.memory_space<vmem>>) attributes {dimension_semantics = [#tpu.dimension_semantics<parallel>], iteration_bounds = array<i64: 2>, scalar_prefetch = 0 : i64, scratch_operands = 0 : i64, tpu.core_type = #tpu.core_type<tc>, window_params = [{transform_indices = @transform_0, window_bounds = array<i64: 3>}, {transform_indices = @transform_1, window_bounds = array<i64: 2, 512>}, {transform_indices = @transform_2, window_bounds = array<i64: 1, 512>}]} {
    %c0 = arith.constant 0 : index
    %0 = memref.load %arg1[%c0] : memref<3xf32, #tpu.memory_space<smem>>
    %c1 = arith.constant 1 : index
    %1 = memref.load %arg1[%c1] : memref<3xf32, #tpu.memory_space<smem>>
    %c2 = arith.constant 2 : index
    %2 = memref.load %arg1[%c2] : memref<3xf32, #tpu.memory_space<smem>>
    %c0_0 = arith.constant 0 : index
    %c0_1 = arith.constant 0 : index
    %3 = vector.load %arg2[%c0_0, %c0_1] : memref<2x512xf32, #tpu.memory_space<vmem>>, vector<2x512xf32>
    %4 = vector.extract_strided_slice %3 {offsets = [0, 0], sizes = [1, 512], strides = [1, 1]} : vector<2x512xf32> to vector<1x512xf32>
    %5 = vector.broadcast %0 : f32 to vector<1x512xf32>
    %6 = arith.mulf %4, %5 : vector<1x512xf32>
    %7 = vector.extract_strided_slice %3 {offsets = [1, 0], sizes = [1, 512], strides = [1, 1]} : vector<2x512xf32> to vector<1x512xf32>
    %8 = vector.broadcast %1 : f32 to vector<1x512xf32>
    %9 = arith.mulf %7, %8 : vector<1x512xf32>
    %10 = arith.addf %6, %9 : vector<1x512xf32>
    %11 = vector.broadcast %2 : f32 to vector<1x512xf32>
    %12 = arith.addf %10, %11 : vector<1x512xf32>
    %c0_2 = arith.constant 0 : index
    %c0_3 = arith.constant 0 : index
    %13 = vector.load %arg3[%c0_2, %c0_3] : memref<1x512xf32, #tpu.memory_space<vmem>>, vector<1x512xf32>
    tpu.vector_store %arg3[%c0_2, %c0_3], %12 {strides = array<i32>} : memref<1x512xf32, #tpu.memory_space<vmem>>, vector<1x512xf32>,
    return
  }
  func.func @transform_0(%arg0: i32) -> i32 {
    %c0_i32 = arith.constant 0 : i32
    %c0_i32_0 = arith.constant 0 : i32
    return %c0_i32 : i32
  }
  func.func @transform_1(%arg0: i32) -> (i32, i32) {
    %c0_i32 = arith.constant 0 : i32
    %c0_i32_0 = arith.constant 0 : i32
    return %c0_i32, %arg0 : i32, i32
  }
  func.func @transform_2(%arg0: i32) -> (i32, i32) {
    %c0_i32 = arith.constant 0 : i32
    %c0_i32_0 = arith.constant 0 : i32
    return %c0_i32, %arg0 : i32, i32
  }
}

</mosaic_0001>

<llo_original>
// kernel: tpu_custom_call.1
$region0: #{tpu_custom_call.1}
  #allocation0 [shape = 'u32[]', space=smem, size = 0x4, offset = 0x4, fixed_abs, tag = 'smem constant byte address 0x4 - core index']
  #allocation1 [shape = 'u32[144,128]{1,0:T(1,128)}', space=vmem, size = 0x12000, scoped, tag = 'internal scratch']
  %s0 = inlined_call_operand.hbm [shape: f32[3], index: 0, kind: input, shape index: {}]
  %s1 = inlined_call_operand.hbm [shape: f32[2,1024], index: 1, kind: input, shape index: {}]
  %s2 = inlined_call_operand.hbm [shape: f32[1,1024], index: 2, kind: output, shape index: {}]
  %s3 = sld [smem:[#allocation0]]
  $region49: #{tpu_custom_call.1} parent=0
    _
  %s5 = ssub.s32 1, %s3
  %s6 = scalar_select 0, %s5, %s3
  $region1: #{tpu_custom_call.1} parent=0
    #allocation2 [shape = 'u8[512]{0}', space=smem, size = 0x200, scoped, tag = 'input window, operand 0, single buffered']
    #allocation3 [shape = 's32[2]{0}', space=sflag, size = 0x8, scoped, tag = 'scoped memory for tpu_custom_call.1']
    #allocation4 [shape = 's32[2]{0}', space=sflag, size = 0x8, scoped, tag = 'scoped memory for tpu_custom_call.1']
    #allocation5 [shape = 's32[2]{0}', space=sflag, size = 0x8, scoped, tag = 'scoped memory for tpu_custom_call.1']
    #allocation6 [shape = 'u8[8192]{0}', space=vmem, size = 0x2000, scoped, tag = 'input window, operand 1']
    #allocation7 [shape = 'u8[4096]{0}', space=vmem, size = 0x1000, scoped, tag = 'output window, operand 0']
    %7 = vsyncpa [#allocation5], 0
    %8 = vsyncpa [#allocation3], 0
    %s9 = scalar_lea.sflag [#allocation3], 1
    %10 = vsyncpa %s9, 0
    %11 = vsyncpa [#allocation4], 0
    %s12 = scalar_lea.sflag [#allocation4], 1
    %13 = vsyncpa %s12, 0
    loop: start=0, step=1, limit=4
    $region2: #{tpu_custom_call.1} parent=1 // loop_pre_header
      _
    $region3: #{tpu_custom_call.1} parent=1 // loop_header
      %s15 = sphi 0, %s19
      %p16 = scmp.ge.s32.totalorder %s15, 4
      %s23 = sphi 0, %s23
      %s25 = sphi 0, %s23
      %s26 = sphi 0, %s25
      %s40 = sphi 0, %s26
      %s46 = sphi 0, %s48
      %s49 = sphi 0, %s46
      %s50 = sphi 0, %s49
      %s66 = sphi 0, %s50
      %s72 = sphi 0, %s74
      %s75 = sphi 0, %s72
      %s76 = sphi 0, %s75
      %s92 = sphi 0, %s76
    $region4: #{tpu_custom_call.1} parent=1 // loop_header_branch
      %18 = sbr.rel (%p16) target = $region8
    $region5: #{tpu_custom_call.1} parent=1 // loop_body
      %s20 = ssub.s32 %s15, 1
      %s21 = ssub.s32 %s15, 2
      %s22 = sadd.s32 %s15, 1
      %s24 = sadd.s32 %s23, 1
      %p27 = scmp.eq.s32.totalorder %s15, 1
      %p28 = scmp.ne.s32.totalorder %s23, %s25
      %p29 = scmp.eq.s32.totalorder %s15, 0
      %p30 = por %p28, %p29
      %p31 = scmp.ne.s32.totalorder %s23, %s25
      %p32 = scmp.eq.s32.totalorder %s20, 1
      %p33 = por %p31, %p32
      %p34 = scmp.ne.s32.totalorder %s25, %s26
      %p35 = scmp.eq.s32.totalorder %s20, 0
      %p36 = por %p34, %p35
      %p37 = scmp.ne.s32.totalorder %s25, %s26
      %p38 = scmp.eq.s32.totalorder %s21, 1
      %p39 = por %p37, %p38
      %p41 = scmp.ne.s32.totalorder %s26, %s40
      %p42 = scmp.eq.s32.totalorder %s21, 0
      %p43 = por %p41, %p42
      %s44 = ssub.s32 %s15, %s22
      %p45 = scmp.eq.s32.totalorder %s44, 0
      %s47 = sadd.s32 %s46, 1
      %s48 = scalar_select %p45, %s46, %s47
      %p51 = pneg %p45
      %p52 = scmp.eq.s32.totalorder %s15, 1
      %p53 = por %p51, %p52
      %p54 = scmp.ne.s32.totalorder %s46, %s49
      %p55 = scmp.eq.s32.totalorder %s15, 0
      %p56 = por %p54, %p55
      %p57 = scmp.ne.s32.totalorder %s46, %s49
      %p58 = scmp.eq.s32.totalorder %s20, 1
      %p59 = por %p57, %p58
      %p60 = scmp.ne.s32.totalorder %s49, %s50
      %p61 = scmp.eq.s32.totalorder %s20, 0
      %p62 = por %p60, %p61
      %p63 = scmp.ne.s32.totalorder %s49, %s50
      %p64 = scmp.eq.s32.totalorder %s21, 1
      %p65 = por %p63, %p64
      %p67 = scmp.ne.s32.totalorder %s50, %s66
      %p68 = scmp.eq.s32.totalorder %s21, 0
      %p69 = por %p67, %p68
      %s70 = ssub.s32 %s15, %s22
      %p71 = scmp.eq.s32.totalorder %s70, 0
      %s73 = sadd.s32 %s72, 1
      %s74 = scalar_select %p71, %s72, %s73
      %p77 = pneg %p71
      %p78 = scmp.eq.s32.totalorder %s15, 1
      %p79 = por %p77, %p78
      %p80 = scmp.ne.s32.totalorder %s72, %s75
      %p81 = scmp.eq.s32.totalorder %s15, 0
      %p82 = por %p80, %p81
      %p83 = scmp.ne.s32.totalorder %s72, %s75
      %p84 = scmp.eq.s32.totalorder %s20, 1
      %p85 = por %p83, %p84
      %p86 = scmp.ne.s32.totalorder %s75, %s76
      %p87 = scmp.eq.s32.totalorder %s20, 0
      %p88 = por %p86, %p87
      %p89 = scmp.ne.s32.totalorder %s75, %s76
      %p90 = scmp.eq.s32.totalorder %s21, 1
      %p91 = por %p89, %p90
      %p93 = scmp.ne.s32.totalorder %s76, %s92
      %p94 = scmp.eq.s32.totalorder %s21, 0
      %p95 = por %p93, %p94
      %p96 = scmp.le.s32.totalorder 1, %s15
      %p97 = scmp.lt.s32.totalorder %s15, 3
      %p98 = pnand %p96, %p97
      %p99 = pneg %p98
      // Predicated region
      $region9: #{tpu_custom_call.1} parent=5 // pred_check
        _
      $region10: #{tpu_custom_call.1} parent=5 // pred_check_branch
        %101 = sbr.rel (%p98) target = $region12
      $region11: #{tpu_custom_call.1} parent=5 // pred_region
        %s102 = ssub.s32 %s15, 1
        // Predicated region
        $region13: #{tpu_custom_call.1} parent=11 // pred_check
          %p103 = pneg %p36
        $region14: #{tpu_custom_call.1} parent=11 // pred_check_branch
          %105 = sbr.rel (%p103) target = $region16
        $region15: #{tpu_custom_call.1} parent=11 // pred_region
          %s107 = ssub.s32 16, 16
          %108 = vsyncadd [#allocation5], %s107
          %111 = dma.hbm_to_smem %s0, 16, [#allocation2], [#allocation5]
        $region16: #{tpu_custom_call.1} parent=11 // pred_fallthru
          _
      $region12: #{tpu_custom_call.1} parent=5 // pred_fallthru
        _
      %p112 = scmp.lt.s32.totalorder %s15, 2
      // Predicated region
      $region17: #{tpu_custom_call.1} parent=5 // pred_check
        %p113 = pneg %p112
      $region18: #{tpu_custom_call.1} parent=5 // pred_check_branch
        %115 = sbr.rel (%p113) target = $region20
      $region19: #{tpu_custom_call.1} parent=5 // pred_region
        // Predicated region
        $region21: #{tpu_custom_call.1} parent=19 // pred_check
          %p116 = pneg %p56
        $region22: #{tpu_custom_call.1} parent=19 // pred_check_branch
          %118 = sbr.rel (%p116) target = $region24
        $region23: #{tpu_custom_call.1} parent=19 // pred_region
          %s119 = sand.u32 %s46, 1
          %s120 = scalar_lea.sflag [#allocation3], %s119
          %s121 = sand.u32 %s46, 1
          %s122 = smul.addr %s121, 8
          %s123 = scalar_lea.vmem [#allocation6], %s122
          %s124 = smul.u32 4, %s15
          %s126 = ssub.s32 128, 128
          %127 = vsyncadd %s120, %s126
          %s128 = smul.addr %s124, 32
          %s129 = scalar_lea.hbm %s1, %s128
          %s131 = sshll.u32 %s123, 4
          %s132 = int_to_ptr.vmem [resolvable:$true] %s131
          %134 = dma.hbm_to_vmem [thread:$0]  %s129, 128, %s132, %s120
        $region24: #{tpu_custom_call.1} parent=19 // pred_fallthru
          _
      $region20: #{tpu_custom_call.1} parent=5 // pred_fallthru
        _
      %p135 = scmp.le.s32.totalorder 1, %s15
      %p136 = scmp.lt.s32.totalorder %s15, 3
      %p137 = pnand %p135, %p136
      %p138 = pneg %p137
      // Predicated region
      $region25: #{tpu_custom_call.1} parent=5 // pred_check
        _
      $region26: #{tpu_custom_call.1} parent=5 // pred_check_branch
        %140 = sbr.rel (%p137) target = $region28
      $region27: #{tpu_custom_call.1} parent=5 // pred_region
        %s141 = ssub.s32 %s15, 1
        // Predicated region
        $region29: #{tpu_custom_call.1} parent=27 // pred_check
          %p142 = pneg %p36
        $region30: #{tpu_custom_call.1} parent=27 // pred_check_branch
          %144 = sbr.rel (%p142) target = $region32
        $region31: #{tpu_custom_call.1} parent=27 // pred_region
          %145 = dma.done [#allocation5], 16
        $region32: #{tpu_custom_call.1} parent=27 // pred_fallthru
          _
        %s146 = sand.u32 %s49, 1
        %s147 = scalar_lea.sflag [#allocation3], %s146
        %s148 = sand.u32 %s49, 1
        %s149 = smul.addr %s148, 8
        %s150 = scalar_lea.vmem [#allocation6], %s149
        // Predicated region
        $region33: #{tpu_custom_call.1} parent=27 // pred_check
          %p151 = pneg %p62
        $region34: #{tpu_custom_call.1} parent=27 // pred_check_branch
          %153 = sbr.rel (%p151) target = $region36
        $region35: #{tpu_custom_call.1} parent=27 // pred_region
          %154 = dma.done %s147, 128
        $region36: #{tpu_custom_call.1} parent=27 // pred_fallthru
          _
        %155 = sfence
        %p156 = pneg %p36
        %p157 = pneg %p33
        %s158 = sand.u32 %s49, 1
        %s159 = scalar_lea.sflag [#allocation3], %s158
        %s160 = sand.u32 %s49, 1
        %s161 = smul.addr %s160, 8
        %s162 = scalar_lea.vmem [#allocation6], %s161
        %p163 = pneg %p62
        %p164 = pneg %p59
        %p165 = pneg %p88
        %p166 = pneg %p85
        %s167 = sand.u32 %s75, 1
        %s168 = scalar_lea.sflag [#allocation4], %s167
        %s169 = sand.u32 %s75, 1
        %s170 = smul.addr %s169, 4
        %s171 = scalar_lea.vmem [#allocation7], %s170
        %s172 = smul.u32 4, %s20
        %s173 = smul.u32 4, %s20
        %s174 = sld [smem:[#allocation2]]
        %s175 = sld [smem:[#allocation2 + $0x1]]
        %s176 = sld [smem:[#allocation2 + $0x2]]
        %v177 = vld [vmem:[%s150] sm:$0xff]
        %v178 = vstv %s174
        %v179 = vmul.f32 %v177, %v178
        %v180 = vstv %s175
        %v181 = vmul.f32 %v177, %v180
        %v183 = vrot.slane %v181, 7
        %v184 = vrot.slane %v183, 2
        %v186 = vadd.f32 %v179, %v184
        %v187 = vstv %s176
        %v188 = vadd.f32 %v186, %v187
        %v191 = vunpack.c.l.s4 1966171168
        %v192 = vunpack.c.0.s8 %v191
        %v193 = vlaneseq
        %v194 = vshrl.u32 %v193, 7
        %v195 = vsub.s32 %v192, %v194
        %v196 = vrot.slane %v188, %v195
        %v198 = vlaneseq
        %vm199 = vcmp.ge.s32.totalorder %v198, 0
        %vm200 = vcmp.lt.s32.totalorder %v198, 512
        %vm201 = vmand %vm199, %vm200
        %202 = vst.msk [vmem:[%s171] sm:$0xf] %vm201, %v196
        %s203 = sand.u32 %s75, 1
        %s204 = scalar_lea.sflag [#allocation4], %s203
        %s205 = sand.u32 %s75, 1
        %s206 = smul.addr %s205, 4
        %s207 = scalar_lea.vmem [#allocation7], %s206
        // Predicated region
        $region37: #{tpu_custom_call.1} parent=27 // pred_check
          %p208 = pneg %p85
        $region38: #{tpu_custom_call.1} parent=27 // pred_check_branch
          %210 = sbr.rel (%p208) target = $region40
        $region39: #{tpu_custom_call.1} parent=27 // pred_region
          %s211 = smul.u32 4, %s20
          %s213 = ssub.s32 64, 64
          %214 = vsyncadd %s204, %s213
          %s215 = smul.addr %s211, 16
          %s216 = scalar_lea.hbm %s2, %s215
          %s218 = sshll.u32 %s207, 4
          %s219 = int_to_ptr.vmem [resolvable:$true] %s218
          %221 = dma.vmem_to_hbm [thread:$0]  %s219, 64, %s216, %s204
        $region40: #{tpu_custom_call.1} parent=27 // pred_fallthru
          _
      $region28: #{tpu_custom_call.1} parent=5 // pred_fallthru
        _
      %p222 = scmp.le.s32.totalorder 2, %s15
      // Predicated region
      $region41: #{tpu_custom_call.1} parent=5 // pred_check
        %p223 = pneg %p222
      $region42: #{tpu_custom_call.1} parent=5 // pred_check_branch
        %225 = sbr.rel (%p223) target = $region44
      $region43: #{tpu_custom_call.1} parent=5 // pred_region
        %s226 = ssub.s32 %s15, 2
        // Predicated region
        $region45: #{tpu_custom_call.1} parent=43 // pred_check
          %p227 = pneg %p91
        $region46: #{tpu_custom_call.1} parent=43 // pred_check_branch
          %229 = sbr.rel (%p227) target = $region48
        $region47: #{tpu_custom_call.1} parent=43 // pred_region
          %s230 = sand.u32 %s76, 1
          %s231 = scalar_lea.sflag [#allocation4], %s230
          %s232 = sand.u32 %s76, 1
          %s233 = smul.addr %s232, 4
          %s234 = scalar_lea.vmem [#allocation7], %s233
          %235 = dma.done %s231, 64
        $region48: #{tpu_custom_call.1} parent=43 // pred_fallthru
          _
      $region44: #{tpu_custom_call.1} parent=5 // pred_fallthru
        _
    $region6: #{tpu_custom_call.1} parent=1 // loop_footer
      %s19 = sadd.s32 1, %s15
    $region7: #{tpu_custom_call.1} parent=1 // loop_footer_branch
      %14 = sbr.rel target = $region3
    $region8: #{tpu_custom_call.1} parent=1 // loop_exit
      _
    %236 = vsyncpa [#allocation3], 1
    %s237 = scalar_lea.sflag [#allocation3], 1
    %238 = vsyncpa %s237, 1
    %239 = vsyncpa [#allocation4], 1
    %s240 = scalar_lea.sflag [#allocation4], 1
    %241 = vsyncpa %s240, 1
    %242 = vsyncpa [#allocation5], 1
    %s243 = scalar_lea.sflag [#allocation5], 1
    %244 = vsyncpa %s243, 1

</llo_original>
